<compile_context>
chip_gen: v7x
topology: tpu7x:2x2x1
jax: 0.10.0
libtpu: 0.0.40
codegen_flags: <defaults>
</compile_context>

<pallas_src>
import jax
import jax.numpy as jnp
from jax.experimental import pallas as pl
from jax.experimental.pallas import tpu as pltpu

LANE = 128    # TPU lane width; hidden layer is padded to this (50 -> 128).
HIDDEN = 50   # true hidden width of Net_big


def _round_up(x: int, m: int) -> int:
    return (x + m - 1) // m * m


def _mlp_kernel(x_ref, w1_ref, b1_ref, w2_ref, b2_ref, w3_ref, b3_ref, o_ref):
    """One batch tile of the full 3-layer MLP. All operands already in VMEM."""
    cdt = w1_ref.dtype                     # MXU operand dtype (f32 or bf16)
    x = x_ref[...].astype(cdt)             # in-kernel cast (no-op for f32)
    # fc1 + ReLU  (f32 accumulation, f32 elementwise epilogue)
    h1 = jnp.dot(x, w1_ref[...], preferred_element_type=jnp.float32) + b1_ref[...]
    h1 = jnp.maximum(h1, 0.0)
    # fc2 + ReLU
    h2 = jnp.dot(h1.astype(cdt), w2_ref[...],
                 preferred_element_type=jnp.float32) + b2_ref[...]
    h2 = jnp.maximum(h2, 0.0)
    # out (no activation) — written at the true N_ACTIONS width
    o_ref[...] = (jnp.dot(h2.astype(cdt), w3_ref[...],
                          preferred_element_type=jnp.float32)
                  + b3_ref[...]).astype(o_ref.dtype)


def init_params(key, n_states, n_actions, hidden=HIDDEN):
    """Unpadded params mirroring the PyTorch module.
    Weights ~ N(0, 0.1), stored as (in, out) so the kernel computes x @ W.
    Biases ~ U(-1/sqrt(fan_in), 1/sqrt(fan_in)) (PyTorch Linear default)."""
    ks = jax.random.split(key, 6)

    def w(k, fan_in, fan_out):
        return (0.1 * jax.random.normal(k, (fan_in, fan_out))).astype(jnp.float32)

    def b(k, fan_in, fan_out):
        bound = 1.0 / jnp.sqrt(float(fan_in))
        return jax.random.uniform(k, (1, fan_out), minval=-bound,
                                  maxval=bound).astype(jnp.float32)

    return {
        "w1": w(ks[0], n_states, hidden),  "b1": b(ks[1], n_states, hidden),
        "w2": w(ks[2], hidden, hidden),    "b2": b(ks[3], hidden, hidden),
        "w3": w(ks[4], hidden, n_actions), "b3": b(ks[5], hidden, n_actions),
    }


def pad_params(params, compute_dtype=jnp.float32):
    """One-time padding of the *hidden* dimension to 128 lanes.
    Input (n_states) and output (n_actions) widths are kept at their true
    sizes so the kernel's HBM I/O is narrow.  Weights are cast to
    `compute_dtype` (f32, or bf16 on v6e/v7x for large batches); biases stay
    f32 since the bias-add/ReLU epilogue runs post-accumulation in f32."""
    n_states, hidden = params["w1"].shape
    n_actions = params["w3"].shape[1]
    hp = _round_up(hidden, LANE)

    def pad_w(w, pad_in, pad_out):
        return jnp.pad(w.astype(compute_dtype), ((0, pad_in), (0, pad_out)))

    def pad_b(b, pad_out):
        return jnp.pad(b.reshape(1, -1).astype(jnp.float32), ((0, 0), (0, pad_out)))

    return {
        "w1": pad_w(params["w1"], 0, hp - hidden),            # (n_states, 128)
        "b1": pad_b(params["b1"], hp - hidden),                # (1, 128)
        "w2": pad_w(params["w2"], hp - hidden, hp - hidden),   # (128, 128)
        "b2": pad_b(params["b2"], hp - hidden),                # (1, 128)
        "w3": pad_w(params["w3"], hp - hidden, 0),             # (128, n_actions)
        "b3": pad_b(params["b3"], 0),                          # (1, n_actions)
    }


def net_big_forward(x, padded_params, *, tile_b=2048):
    """x: (B, N_STATES) f32. padded_params: output of pad_params (cached).
    Returns (B, N_ACTIONS) f32."""
    w1, b1 = padded_params["w1"], padded_params["b1"]
    w2, b2 = padded_params["w2"], padded_params["b2"]
    w3, b3 = padded_params["w3"], padded_params["b3"]

    B, n_states = x.shape
    assert w1.shape[0] == n_states, "x feature width must match w1 rows"
    H = w2.shape[0]            # padded hidden width (multiple of 128)
    n_actions = w3.shape[1]    # true action width

    # Batch tile: multiple of 8, at most tile_b, and capped at ceil(B/2) so the
    # grid has >= 2 steps whenever possible (both v7x TensorCores get work).
    half_b = _round_up(max(pl.cdiv(B, 2), 8), 8)
    tb = _round_up(min(tile_b, half_b), 8)
    grid = (pl.cdiv(B, tb),)   # partial last block is clipped by Pallas

    const = lambda i: (0, 0)   # weights/biases: VMEM-resident across the grid
    batch = lambda i: (i, 0)   # x / out: streamed per batch tile

    cost = pl.CostEstimate(
        flops=2 * B * (n_states * H + H * H + H * n_actions),
        transcendentals=0,
        bytes_accessed=(B * (n_states + n_actions) * 4
                        + (n_states * H + H * H + H * n_actions)
                        * jnp.dtype(w1.dtype).itemsize
                        + (H + H + n_actions) * 4),
    )

    return pl.pallas_call(
        _mlp_kernel,
        out_shape=jax.ShapeDtypeStruct((B, n_actions), jnp.float32),
        grid=grid,
        in_specs=[
            pl.BlockSpec((tb, n_states), batch),   # x tile (true feature width)
            pl.BlockSpec((n_states, H), const),    # w1
            pl.BlockSpec((1, H), const),           # b1
            pl.BlockSpec((H, H), const),           # w2
            pl.BlockSpec((1, H), const),           # b2
            pl.BlockSpec((H, n_actions), const),   # w3 (true action width)
            pl.BlockSpec((1, n_actions), const),   # b3
        ],
        out_specs=pl.BlockSpec((tb, n_actions), batch),
        compiler_params=pltpu.CompilerParams(
            dimension_semantics=("parallel",)),    # batch axis -> both TCs on v7x
        cost_estimate=cost,
    )(x, w1, b1, w2, b2, w3, b3)


def _reference_forward(x, p):
    h1 = jnp.maximum(x @ p["w1"] + p["b1"], 0.0)
    h2 = jnp.maximum(h1 @ p["w2"] + p["b2"], 0.0)
    return h2 @ p["w3"] + p["b3"]


if __name__ == "__main__":
    # Small shapes consistent with a typical gym env: N_STATES=8, N_ACTIONS=4.
    N_STATES, N_ACTIONS, BATCH = 8, 4, 2

    key = jax.random.PRNGKey(0)
    k_params, k_x, k_xl = jax.random.split(key, 3)
    params = init_params(k_params, N_STATES, N_ACTIONS)
    padded = pad_params(params)                 # one-time padded/cached weights (f32)
    # On v6e/v7x with large batches, use pad_params(params, jnp.bfloat16) instead.

    # --- primary small-shape check (B=2, single partial block) ---
    x = jax.random.normal(k_x, (BATCH, N_STATES), dtype=jnp.float32)
    out = jax.block_until_ready(net_big_forward(x, padded))
    ref = _reference_forward(x, params)
    assert out.shape == (BATCH, N_ACTIONS)
    assert jnp.allclose(out, ref, atol=1e-5, rtol=1e-5)

    # --- secondary check: grid > 1 plus an uneven trailing batch block ---
    BL = 1000
    xl = jax.random.normal(k_xl, (BL, N_STATES), dtype=jnp.float32)
    out_l = jax.block_until_ready(net_big_forward(xl, padded, tile_b=2048))
    ref_l = _reference_forward(xl, params)
    assert out_l.shape == (BL, N_ACTIONS)
    assert jnp.allclose(out_l, ref_l, atol=1e-5, rtol=1e-5)

    print("KERNEL_OK")
</pallas_src>

<mosaic_0001>
module attributes {stable_mosaic.version = 11 : i64} {
  func.func @_mlp_kernel(%arg0: i32, %arg1: memref<8x8xf32, #tpu.memory_space<vmem>>, %arg2: memref<8x128xf32, #tpu.memory_space<vmem>>, %arg3: memref<1x128xf32, #tpu.memory_space<vmem>>, %arg4: memref<128x128xf32, #tpu.memory_space<vmem>>, %arg5: memref<1x128xf32, #tpu.memory_space<vmem>>, %arg6: memref<128x4xf32, #tpu.memory_space<vmem>>, %arg7: memref<1x4xf32, #tpu.memory_space<vmem>>, %arg8: memref<8x4xf32, #tpu.memory_space<vmem>>) attributes {dimension_semantics = [#tpu.dimension_semantics<parallel>], iteration_bounds = array<i64: 1>, scalar_prefetch = 0 : i64, scratch_operands = 0 : i64, tpu.core_type = #tpu.core_type<tc>, window_params = [{transform_indices = @transform_0, window_bounds = array<i64: 8, 8>}, {pipeline_mode = #tpu.pipeline_mode<synchronous>, transform_indices = @transform_1, window_bounds = array<i64: 8, 128>}, {pipeline_mode = #tpu.pipeline_mode<synchronous>, transform_indices = @transform_2, window_bounds = array<i64: 1, 128>}, {pipeline_mode = #tpu.pipeline_mode<synchronous>, transform_indices = @transform_3, window_bounds = array<i64: 128, 128>}, {pipeline_mode = #tpu.pipeline_mode<synchronous>, transform_indices = @transform_4, window_bounds = array<i64: 1, 128>}, {pipeline_mode = #tpu.pipeline_mode<synchronous>, transform_indices = @transform_5, window_bounds = array<i64: 128, 4>}, {pipeline_mode = #tpu.pipeline_mode<synchronous>, transform_indices = @transform_6, window_bounds = array<i64: 1, 4>}, {transform_indices = @transform_7, window_bounds = array<i64: 8, 4>}]} {
    %c0 = arith.constant 0 : index
    %c0_0 = arith.constant 0 : index
    %0 = vector.load %arg1[%c0, %c0_0] : memref<8x8xf32, #tpu.memory_space<vmem>>, vector<8x8xf32>
    %c0_1 = arith.constant 0 : index
    %c0_2 = arith.constant 0 : index
    %1 = vector.load %arg2[%c0_1, %c0_2] : memref<8x128xf32, #tpu.memory_space<vmem>>, vector<8x128xf32>
    %cst = arith.constant dense<0.000000e+00> : vector<8x128xf32>
    %2 = tpu.matmul %0, %1, %cst {dimension_numbers = #tpu.dot_dimension_numbers<[1], [0], [0], [1], [0, 0, 1, 1], [], []>} : vector<8x8xf32>, vector<8x128xf32>, vector<8x128xf32> -> vector<8x128xf32>
    %c0_3 = arith.constant 0 : index
    %c0_4 = arith.constant 0 : index
    %3 = vector.load %arg3[%c0_3, %c0_4] : memref<1x128xf32, #tpu.memory_space<vmem>>, vector<1x128xf32>
    %4 = vector.broadcast %3 : vector<1x128xf32> to vector<8x128xf32>
    %5 = arith.addf %2, %4 : vector<8x128xf32>
    %cst_5 = arith.constant 0.000000e+00 : f32
    %6 = vector.broadcast %cst_5 : f32 to vector<8x128xf32>
    %7 = arith.maximumf %5, %6 : vector<8x128xf32>
    %c0_6 = arith.constant 0 : index
    %c0_7 = arith.constant 0 : index
    %8 = vector.load %arg4[%c0_6, %c0_7] : memref<128x128xf32, #tpu.memory_space<vmem>>, vector<128x128xf32>
    %cst_8 = arith.constant dense<0.000000e+00> : vector<8x128xf32>
    %9 = tpu.matmul %7, %8, %cst_8 {dimension_numbers = #tpu.dot_dimension_numbers<[1], [0], [0], [1], [0, 0, 1, 1], [], []>} : vector<8x128xf32>, vector<128x128xf32>, vector<8x128xf32> -> vector<8x128xf32>
    %c0_9 = arith.constant 0 : index
    %c0_10 = arith.constant 0 : index
    %10 = vector.load %arg5[%c0_9, %c0_10] : memref<1x128xf32, #tpu.memory_space<vmem>>, vector<1x128xf32>
    %11 = vector.broadcast %10 : vector<1x128xf32> to vector<8x128xf32>
    %12 = arith.addf %9, %11 : vector<8x128xf32>
    %cst_11 = arith.constant 0.000000e+00 : f32
    %13 = vector.broadcast %cst_11 : f32 to vector<8x128xf32>
    %14 = arith.maximumf %12, %13 : vector<8x128xf32>
    %c0_12 = arith.constant 0 : index
    %c0_13 = arith.constant 0 : index
    %15 = vector.load %arg6[%c0_12, %c0_13] : memref<128x4xf32, #tpu.memory_space<vmem>>, vector<128x4xf32>
    %cst_14 = arith.constant dense<0.000000e+00> : vector<8x4xf32>
    %16 = tpu.matmul %14, %15, %cst_14 {dimension_numbers = #tpu.dot_dimension_numbers<[1], [0], [0], [1], [0, 0, 1, 1], [], []>} : vector<8x128xf32>, vector<128x4xf32>, vector<8x4xf32> -> vector<8x4xf32>
    %c0_15 = arith.constant 0 : index
    %c0_16 = arith.constant 0 : index
    %17 = vector.load %arg7[%c0_15, %c0_16] : memref<1x4xf32, #tpu.memory_space<vmem>>, vector<1x4xf32>
    %18 = vector.broadcast %17 : vector<1x4xf32> to vector<8x4xf32>
    %19 = arith.addf %16, %18 : vector<8x4xf32>
    %c0_17 = arith.constant 0 : index
    %c0_18 = arith.constant 0 : index
    %20 = vector.load %arg8[%c0_17, %c0_18] : memref<8x4xf32, #tpu.memory_space<vmem>>, vector<8x4xf32>
    tpu.vector_store %arg8[%c0_17, %c0_18], %19 {strides = array<i32>} : memref<8x4xf32, #tpu.memory_space<vmem>>, vector<8x4xf32>,
    return
  }
  func.func @transform_0(%arg0: i32) -> (i32, i32) {
    %c0_i32 = arith.constant 0 : i32
    %c0_i32_0 = arith.constant 0 : i32
    return %arg0, %c0_i32 : i32, i32
  }
  func.func @transform_1(%arg0: i32) -> (i32, i32) {
    %c0_i32 = arith.constant 0 : i32
    %c0_i32_0 = arith.constant 0 : i32
    %c0_i32_1 = arith.constant 0 : i32
    return %c0_i32, %c0_i32_0 : i32, i32
  }
  func.func @transform_2(%arg0: i32) -> (i32, i32) {
    %c0_i32 = arith.constant 0 : i32
    %c0_i32_0 = arith.constant 0 : i32
    %c0_i32_1 = arith.constant 0 : i32
    return %c0_i32, %c0_i32_0 : i32, i32
  }
  func.func @transform_3(%arg0: i32) -> (i32, i32) {
    %c0_i32 = arith.constant 0 : i32
    %c0_i32_0 = arith.constant 0 : i32
    %c0_i32_1 = arith.constant 0 : i32
    return %c0_i32, %c0_i32_0 : i32, i32
  }
  func.func @transform_4(%arg0: i32) -> (i32, i32) {
    %c0_i32 = arith.constant 0 : i32
    %c0_i32_0 = arith.constant 0 : i32
    %c0_i32_1 = arith.constant 0 : i32
    return %c0_i32, %c0_i32_0 : i32, i32
  }
  func.func @transform_5(%arg0: i32) -> (i32, i32) {
    %c0_i32 = arith.constant 0 : i32
    %c0_i32_0 = arith.constant 0 : i32
    %c0_i32_1 = arith.constant 0 : i32
    return %c0_i32, %c0_i32_0 : i32, i32
  }
  func.func @transform_6(%arg0: i32) -> (i32, i32) {
    %c0_i32 = arith.constant 0 : i32
    %c0_i32_0 = arith.constant 0 : i32
    %c0_i32_1 = arith.constant 0 : i32
    return %c0_i32, %c0_i32_0 : i32, i32
  }
  func.func @transform_7(%arg0: i32) -> (i32, i32) {
    %c0_i32 = arith.constant 0 : i32
    %c0_i32_0 = arith.constant 0 : i32
    return %arg0, %c0_i32 : i32, i32
  }
}

</mosaic_0001>

<llo_original>
// kernel: tpu_custom_call.1
$region0: #{tpu_custom_call.1}
  #allocation0 [shape = 'u32[]', space=smem, size = 0x4, offset = 0x4, fixed_abs, tag = 'smem constant byte address 0x4 - core index']
  #allocation1 [shape = 'u32[144,128]{1,0:T(1,128)}', space=vmem, size = 0x12000, scoped, tag = 'internal scratch']
  %s0 = inlined_call_operand.vmem [shape: f32[2,8], index: 0, kind: input, shape index: {}]
  %s1 = inlined_call_operand.vmem [shape: f32[8,128], index: 1, kind: input, shape index: {}]
  %s2 = inlined_call_operand.vmem [shape: f32[1,128], index: 2, kind: input, shape index: {}]
  %s3 = inlined_call_operand.vmem [shape: f32[128,128], index: 3, kind: input, shape index: {}]
  %s4 = inlined_call_operand.vmem [shape: f32[1,128], index: 4, kind: input, shape index: {}]
  %s5 = inlined_call_operand.vmem [shape: f32[128,4], index: 5, kind: input, shape index: {}]
  %s6 = inlined_call_operand.vmem [shape: f32[1,4], index: 6, kind: input, shape index: {}]
  %s7 = inlined_call_operand.hbm [shape: f32[2,4], index: 7, kind: output, shape index: {}]
  %s8 = sld [smem:[#allocation0]]
  $region38: #{tpu_custom_call.1} parent=0
    _
  %s10 = ssub.s32 1, %s8
  %s11 = scalar_select 0, %s10, %s8
  $region1: #{tpu_custom_call.1} parent=0
    #allocation2 [shape = 'u8[4096]{0}', space=vmem, size = 0x1000, scoped, tag = 'output window, operand 0, single buffered']
    #allocation3 [shape = 's32[1]{0}', space=sflag, size = 0x4, scoped, tag = 'scoped memory for tpu_custom_call.1']
    %12 = vsyncpa [#allocation3], 0
    // Predicated region
    $region2: #{tpu_custom_call.1} parent=1 // pred_check
      _
    $region3: #{tpu_custom_call.1} parent=1 // pred_check_branch
      %14 = sbr.rel (0) target = $region5
    $region4: #{tpu_custom_call.1} parent=1 // pred_region
      _
    $region5: #{tpu_custom_call.1} parent=1 // pred_fallthru
      _
    // Predicated region
    $region6: #{tpu_custom_call.1} parent=1 // pred_check
      _
    $region7: #{tpu_custom_call.1} parent=1 // pred_check_branch
      %16 = sbr.rel (0) target = $region9
    $region8: #{tpu_custom_call.1} parent=1 // pred_region
      _
    $region9: #{tpu_custom_call.1} parent=1 // pred_fallthru
      _
    // Predicated region
    $region10: #{tpu_custom_call.1} parent=1 // pred_check
      _
    $region11: #{tpu_custom_call.1} parent=1 // pred_check_branch
      %18 = sbr.rel (0) target = $region13
    $region12: #{tpu_custom_call.1} parent=1 // pred_region
      _
    $region13: #{tpu_custom_call.1} parent=1 // pred_fallthru
      _
    // Predicated region
    $region14: #{tpu_custom_call.1} parent=1 // pred_check
      _
    $region15: #{tpu_custom_call.1} parent=1 // pred_check_branch
      %20 = sbr.rel (0) target = $region17
    $region16: #{tpu_custom_call.1} parent=1 // pred_region
      _
    $region17: #{tpu_custom_call.1} parent=1 // pred_fallthru
      _
    // Predicated region
    $region18: #{tpu_custom_call.1} parent=1 // pred_check
      _
    $region19: #{tpu_custom_call.1} parent=1 // pred_check_branch
      %22 = sbr.rel (0) target = $region21
    $region20: #{tpu_custom_call.1} parent=1 // pred_region
      _
    $region21: #{tpu_custom_call.1} parent=1 // pred_fallthru
      _
    // Predicated region
    $region22: #{tpu_custom_call.1} parent=1 // pred_check
      _
    $region23: #{tpu_custom_call.1} parent=1 // pred_check_branch
      %24 = sbr.rel (0) target = $region25
    $region24: #{tpu_custom_call.1} parent=1 // pred_region
      _
    $region25: #{tpu_custom_call.1} parent=1 // pred_fallthru
      _
    // Predicated region
    $region26: #{tpu_custom_call.1} parent=1 // pred_check
      _
    $region27: #{tpu_custom_call.1} parent=1 // pred_check_branch
      %26 = sbr.rel (0) target = $region29
    $region28: #{tpu_custom_call.1} parent=1 // pred_region
      _
    $region29: #{tpu_custom_call.1} parent=1 // pred_fallthru
      _
    %v27 = vld [vmem:[%s0] sm:$0xff]
    %v28 = vld [vmem:[%s1] sm:$0xff]
    %v29 = vld [vmem:[%s2] sm:$0x1]
    %v31 = vlaneseq
    %v32 = vshrl.u32 %v31, 7
    %v33 = vsub.s32 0, %v32
    %v34 = vrot.slane %v29, %v33
    %vm36 = vcmask 64512
    %v38 = vsel %vm36, %v27, 0
    %40 = vmatprep.subr.mxu0 0.0
    %41 = vmatpush1.msra.mxu0 %v28
    %42 = vmatprep.subr.mxu0 0.0
    %43 = vmatpush1.msra.mxu0 0.0
    %44 = vmatprep.subr.mxu0 0.0
    %45 = vmatpush1.msra.mxu0 0.0
    %46 = vmatprep.subr.mxu0 0.0
    %47 = vmatpush1.msra.mxu0 0.0
    %48 = vmatprep.subr.mxu0 0.0
    %49 = vmatpush1.msra.mxu0 0.0
    %50 = vmatprep.subr.mxu0 0.0
    %51 = vmatpush1.msra.mxu0 0.0
    %52 = vmatprep.subr.mxu0 0.0
    %53 = vmatpush1.msra.mxu0 0.0
    %54 = vmatprep.subr.mxu0 0.0
    %55 = vmatpush1.msra.mxu0 0.0
    %56 = vmatprep.subr.mxu0 0.0
    %57 = vmatpush1.msra.mxu0 0.0
    %58 = vmatprep.subr.mxu0 0.0
    %59 = vmatpush1.msra.mxu0 0.0
    %60 = vmatprep.subr.mxu0 0.0
    %61 = vmatpush1.msra.mxu0 0.0
    %62 = vmatprep.subr.mxu0 0.0
    %63 = vmatpush1.msra.mxu0 0.0
    %64 = vmatprep.subr.mxu0 0.0
    %65 = vmatpush1.msra.mxu0 0.0
    %66 = vmatprep.subr.mxu0 0.0
    %67 = vmatpush1.msra.mxu0 0.0
    %68 = vmatprep.subr.mxu0 0.0
    %69 = vmatpush1.msra.mxu0 0.0
    %70 = vmatprep.subr.mxu0 0.0
    %71 = vmatpush1.msra.mxu0 0.0
    %72 = vmatprep.subr.mxu0 0.0
    %73 = vmatpush1.msra.mxu0 0.0
    %74 = vmatprep.subr.mxu0 0.0
    %75 = vmatpush1.msra.mxu0 0.0
    %76 = vmatprep.subr.mxu0 0.0
    %77 = vmatpush1.msra.mxu0 0.0
    %78 = vmatprep.subr.mxu0 0.0
    %79 = vmatpush1.msra.mxu0 0.0
    %80 = vmatprep.subr.mxu0 0.0
    %81 = vmatpush1.msra.mxu0 0.0
    %82 = vmatprep.subr.mxu0 0.0
    %83 = vmatpush1.msra.mxu0 0.0
    %84 = vmatprep.subr.mxu0 0.0
    %85 = vmatpush1.msra.mxu0 0.0
    %86 = vmatprep.subr.mxu0 0.0
    %87 = vmatpush1.msra.mxu0 0.0
    %88 = vmatprep.subr.mxu0 0.0
    %89 = vmatpush1.msra.mxu0 0.0
    %90 = vmatprep.subr.mxu0 0.0
    %91 = vmatpush1.msra.mxu0 0.0
    %92 = vmatprep.subr.mxu0 0.0
    %93 = vmatpush1.msra.mxu0 0.0
    %94 = vmatprep.subr.mxu0 0.0
    %95 = vmatpush1.msra.mxu0 0.0
    %96 = vmatprep.subr.mxu0 0.0
    %97 = vmatpush1.msra.mxu0 0.0
    %98 = vmatprep.subr.mxu0 0.0
    %99 = vmatpush1.msra.mxu0 0.0
    %100 = vmatprep.subr.mxu0 0.0
    %101 = vmatpush1.msra.mxu0 0.0
    %102 = vmatprep.subr.mxu0 0.0
    %103 = vmatpush1.msra.mxu0 0.0
    %104 = vmatprep.mubr.f32.mxu0 0.0
    %105 = vmatmul.mubr.f32.gmra.mrb[0].mxu0 %v38
    %v106 = vpop.f32.mrb[0].mxu0
    %v107 = vadd.f32 %v34, %v106
    %v108 = vpop.f32.mrb[0].mxu0
    %109 = vdwg.mxu0
    %v110 = vmax.f32 %v107, 0.0
    %v111 = vld [vmem:[%s3] sm:$0xff]
    %v112 = vld [vmem:[%s3 + $0x8] sm:$0xff]
    %v113 = vld [vmem:[%s3 + $0x10] sm:$0xff]
    %v114 = vld [vmem:[%s3 + $0x18] sm:$0xff]
    %v115 = vld [vmem:[%s3 + $0x20] sm:$0xff]
    %v116 = vld [vmem:[%s3 + $0x28] sm:$0xff]
    %v117 = vld [vmem:[%s3 + $0x30] sm:$0xff]
    %v118 = vld [vmem:[%s3 + $0x38] sm:$0xff]
    %v119 = vld [vmem:[%s3 + $0x40] sm:$0xff]
    %v120 = vld [vmem:[%s3 + $0x48] sm:$0xff]
    %v121 = vld [vmem:[%s3 + $0x50] sm:$0xff]
    %v122 = vld [vmem:[%s3 + $0x58] sm:$0xff]
    %v123 = vld [vmem:[%s3 + $0x60] sm:$0xff]
    %v124 = vld [vmem:[%s3 + $0x68] sm:$0xff]
    %v125 = vld [vmem:[%s3 + $0x70] sm:$0xff]
    %v126 = vld [vmem:[%s3 + $0x78] sm:$0xff]
    %v127 = vld [vmem:[%s4] sm:$0x1]
    %v129 = vlaneseq
    %v130 = vshrl.u32 %v129, 7
    %v131 = vsub.s32 0, %v130
    %v132 = vrot.slane %v127, %v131
    %134 = vmatprep.subr.mxu0 0.0
    %135 = vmatpush1.msra.mxu0 %v111
    %136 = vmatprep.subr.mxu0 0.0
    %137 = vmatpush1.msra.mxu0 %v112
    %138 = vmatprep.subr.mxu0 0.0
    %139 = vmatpush1.msra.mxu0 %v113
    %140 = vmatprep.subr.mxu0 0.0
    %141 = vmatpush1.msra.mxu0 %v114
    %142 = vmatprep.subr.mxu0 0.0
    %143 = vmatpush1.msra.mxu0 %v115
    %144 = vmatprep.subr.mxu0 0.0
    %145 = vmatpush1.msra.mxu0 %v116
    %146 = vmatprep.subr.mxu0 0.0
    %147 = vmatpush1.msra.mxu0 %v117
    %148 = vmatprep.subr.mxu0 0.0
    %149 = vmatpush1.msra.mxu0 %v118
    %150 = vmatprep.subr.mxu0 0.0
    %151 = vmatpush1.msra.mxu0 %v119
    %152 = vmatprep.subr.mxu0 0.0
    %153 = vmatpush1.msra.mxu0 %v120
    %154 = vmatprep.subr.mxu0 0.0
    %155 = vmatpush1.msra.mxu0 %v121
    %156 = vmatprep.subr.mxu0 0.0
    %157 = vmatpush1.msra.mxu0 %v122
    %158 = vmatprep.subr.mxu0 0.0
    %159 = vmatpush1.msra.mxu0 %v123
    %160 = vmatprep.subr.mxu0 0.0
    %161 = vmatpush1.msra.mxu0 %v124
    %162 = vmatprep.subr.mxu0 0.0
    %163 = vmatpush1.msra.mxu0 %v125
    %164 = vmatprep.subr.mxu0 0.0
    %165 = vmatpush1.msra.mxu0 %v126
    %166 = vmatprep.subr.mxu0 0.0
    %167 = vmatpush1.msra.mxu0 0.0
    %168 = vmatprep.subr.mxu0 0.0
    %169 = vmatpush1.msra.mxu0 0.0
    %170 = vmatprep.subr.mxu0 0.0
    %171 = vmatpush1.msra.mxu0 0.0
    %172 = vmatprep.subr.mxu0 0.0
    %173 = vmatpush1.msra.mxu0 0.0
    %174 = vmatprep.subr.mxu0 0.0
    %175 = vmatpush1.msra.mxu0 0.0
    %176 = vmatprep.subr.mxu0 0.0
    %177 = vmatpush1.msra.mxu0 0.0
    %178 = vmatprep.subr.mxu0 0.0
    %179 = vmatpush1.msra.mxu0 0.0
    %180 = vmatprep.subr.mxu0 0.0
    %181 = vmatpush1.msra.mxu0 0.0
    %182 = vmatprep.subr.mxu0 0.0
    %183 = vmatpush1.msra.mxu0 0.0
    %184 = vmatprep.subr.mxu0 0.0
    %185 = vmatpush1.msra.mxu0 0.0
    %186 = vmatprep.subr.mxu0 0.0
    %187 = vmatpush1.msra.mxu0 0.0
    %188 = vmatprep.subr.mxu0 0.0
    %189 = vmatpush1.msra.mxu0 0.0
    %190 = vmatprep.subr.mxu0 0.0
    %191 = vmatpush1.msra.mxu0 0.0
    %192 = vmatprep.subr.mxu0 0.0
    %193 = vmatpush1.msra.mxu0 0.0
    %194 = vmatprep.subr.mxu0 0.0
    %195 = vmatpush1.msra.mxu0 0.0
    %196 = vmatprep.subr.mxu0 0.0
    %197 = vmatpush1.msra.mxu0 0.0
    %198 = vmatprep.mubr.f32.mxu0 0.0
    %199 = vmatmul.mubr.f32.gmra.mrb[0].mxu0 %v110
    %v200 = vpop.f32.mrb[0].mxu0
    %v201 = vadd.f32 %v132, %v200
    %v202 = vpop.f32.mrb[0].mxu0
    %203 = vdwg.mxu0
    %v204 = vmax.f32 %v201, 0.0
    %v205 = vld [vmem:[%s5] sm:$0xff]
    %v206 = vld [vmem:[%s5 + $0x8] sm:$0xff]
    %v207 = vld [vmem:[%s5 + $0x10] sm:$0xff]
    %v208 = vld [vmem:[%s5 + $0x18] sm:$0xff]
    %v209 = vld [vmem:[%s5 + $0x20] sm:$0xff]
    %v210 = vld [vmem:[%s5 + $0x28] sm:$0xff]
    %v211 = vld [vmem:[%s5 + $0x30] sm:$0xff]
    %v212 = vld [vmem:[%s5 + $0x38] sm:$0xff]
    %v213 = vld [vmem:[%s5 + $0x40] sm:$0xff]
    %v214 = vld [vmem:[%s5 + $0x48] sm:$0xff]
    %v215 = vld [vmem:[%s5 + $0x50] sm:$0xff]
    %v216 = vld [vmem:[%s5 + $0x58] sm:$0xff]
    %v217 = vld [vmem:[%s5 + $0x60] sm:$0xff]
    %v218 = vld [vmem:[%s5 + $0x68] sm:$0xff]
    %v219 = vld [vmem:[%s5 + $0x70] sm:$0xff]
    %v220 = vld [vmem:[%s5 + $0x78] sm:$0xff]
    %v221 = vld [vmem:[%s6] sm:$0x1]
    %v223 = vlaneseq
    %v224 = vshrl.u32 %v223, 7
    %v225 = vsub.s32 0, %v224
    %v226 = vrot.slane %v221, %v225
    %228 = vmatprep.subr.mxu0 0.0
    %229 = vmatpush1.msra.mxu0 %v205
    %230 = vmatprep.subr.mxu0 0.0
    %231 = vmatpush1.msra.mxu0 %v206
    %232 = vmatprep.subr.mxu0 0.0
    %233 = vmatpush1.msra.mxu0 %v207
    %234 = vmatprep.subr.mxu0 0.0
    %235 = vmatpush1.msra.mxu0 %v208
    %236 = vmatprep.subr.mxu0 0.0
    %237 = vmatpush1.msra.mxu0 %v209
    %238 = vmatprep.subr.mxu0 0.0
    %239 = vmatpush1.msra.mxu0 %v210
    %240 = vmatprep.subr.mxu0 0.0
    %241 = vmatpush1.msra.mxu0 %v211
    %242 = vmatprep.subr.mxu0 0.0
    %243 = vmatpush1.msra.mxu0 %v212
    %244 = vmatprep.subr.mxu0 0.0
    %245 = vmatpush1.msra.mxu0 %v213
    %246 = vmatprep.subr.mxu0 0.0
    %247 = vmatpush1.msra.mxu0 %v214
    %248 = vmatprep.subr.mxu0 0.0
    %249 = vmatpush1.msra.mxu0 %v215
    %250 = vmatprep.subr.mxu0 0.0
    %251 = vmatpush1.msra.mxu0 %v216
    %252 = vmatprep.subr.mxu0 0.0
    %253 = vmatpush1.msra.mxu0 %v217
    %254 = vmatprep.subr.mxu0 0.0
    %255 = vmatpush1.msra.mxu0 %v218
    %256 = vmatprep.subr.mxu0 0.0
    %257 = vmatpush1.msra.mxu0 %v219
    %258 = vmatprep.subr.mxu0 0.0
    %259 = vmatpush1.msra.mxu0 %v220
    %260 = vmatprep.subr.mxu0 0.0
    %261 = vmatpush1.msra.mxu0 0.0
    %262 = vmatprep.subr.mxu0 0.0
    %263 = vmatpush1.msra.mxu0 0.0
    %264 = vmatprep.subr.mxu0 0.0
    %265 = vmatpush1.msra.mxu0 0.0
    %266 = vmatprep.subr.mxu0 0.0
    %267 = vmatpush1.msra.mxu0 0.0
    %268 = vmatprep.subr.mxu0 0.0
    %269 = vmatpush1.msra.mxu0 0.0
    %270 = vmatprep.subr.mxu0 0.0
    %271 = vmatpush1.msra.mxu0 0.0
    %272 = vmatprep.subr.mxu0 0.0
    %273 = vmatpush1.msra.mxu0 0.0
    %274 = vmatprep.subr.mxu0 0.0
    %275 = vmatpush1.msra.mxu0 0.0
    %276 = vmatprep.subr.mxu0 0.0
    %277 = vmatpush1.msra.mxu0 0.0
    %278 = vmatprep.subr.mxu0 0.0
    %279 = vmatpush1.msra.mxu0 0.0
    %280 = vmatprep.subr.mxu0 0.0
    %281 = vmatpush1.msra.mxu0 0.0
    %282 = vmatprep.subr.mxu0 0.0
    %283 = vmatpush1.msra.mxu0 0.0
    %284 = vmatprep.subr.mxu0 0.0
    %285 = vmatpush1.msra.mxu0 0.0
    %286 = vmatprep.subr.mxu0 0.0
    %287 = vmatpush1.msra.mxu0 0.0
    %288 = vmatprep.subr.mxu0 0.0
    %289 = vmatpush1.msra.mxu0 0.0
    %290 = vmatprep.subr.mxu0 0.0
    %291 = vmatpush1.msra.mxu0 0.0
    %292 = vmatprep.mubr.f32.mxu0 0.0
    %293 = vmatmul.mubr.f32.gmra.mrb[0].mxu0 %v204
    %v294 = vpop.f32.mrb[0].mxu0
    %v295 = vadd.f32 %v226, %v294
    %v296 = vpop.f32.mrb[0].mxu0
    %297 = vdwg.mxu0
    %vm298 = vcmask 31744
    %299 = vst.msk [vmem:[#allocation2] sm:$0xff] %vm298, %v295
    // Predicated region
    $region30: #{tpu_custom_call.1} parent=1 // pred_check
      _
    $region31: #{tpu_custom_call.1} parent=1 // pred_check_branch
      %301 = sbr.rel (0) target = $region33
    $region32: #{tpu_custom_call.1} parent=1 // pred_region
      %s303 = ssub.s32 128, 32
      %304 = vsyncadd [#allocation3], %s303
      %s305 = sshll.u32 [#allocation2], 4
      %s306 = int_to_ptr.vmem [resolvable:$true] %s305
      %311 = dma.vmem_to_hbm [thread:$0]  %s306, 32, %s7, [#allocation3], 32, 32, 2
    $region33: #{tpu_custom_call.1} parent=1 // pred_fallthru
      _
    // Predicated region
    $region34: #{tpu_custom_call.1} parent=1 // pred_check
      _
    $region35: #{tpu_custom_call.1} parent=1 // pred_check_branch
      %313 = sbr.rel (0) target = $region37
    $region36: #{tpu_custom_call.1} parent=1 // pred_region
      %314 = dma.done [#allocation3], 128
    $region37: #{tpu_custom_call.1} parent=1 // pred_fallthru
      _
    %315 = vsyncpa [#allocation3], 1

</llo_original>
